<compile_context>
chip_gen: v7x
topology: tpu7x:2x2x1
jax: 0.10.0
libtpu: 0.0.40
codegen_flags: <defaults>
</compile_context>

<pallas_src>
import jax
import jax.numpy as jnp
from jax.experimental import pallas as pl
from jax.experimental.pallas import tpu as pltpu

IN_CH = 112
OUT_CH = 64
_MAX_TL = 1024  # f32 x-tile (112,1024) ~= 448 KiB; y-tile (64,1024) = 256 KiB


def _conv1x1_nc_kernel(x_ref, w_ref, b_ref, o_ref):
    # x_ref: (1, IN_CH, TL)   w_ref: (OUT_CH, IN_CH)
    # b_ref: (OUT_CH, 1)      o_ref: (1, OUT_CH, TL)
    acc = jnp.dot(w_ref[...], x_ref[0], preferred_element_type=jnp.float32)
    o_ref[0] = (acc + b_ref[...]).astype(o_ref.dtype)


def _choose_tl(L: int) -> int:
    # Full-extent block is always legal; otherwise tile with a multiple of 128
    # for lane-dense loads/stores and DMA/compute overlap along L.
    if L <= _MAX_TL:
        return L
    return _MAX_TL


def conv1x1_pallas(x_ncl, w_oi, b_o1):
    """x_ncl: (N, IN_CH, L) f32, w_oi: (OUT_CH, IN_CH) f32, b_o1: (OUT_CH, 1) f32."""
    N, C, L = x_ncl.shape
    assert C == IN_CH
    TL = _choose_tl(L)
    grid = (N, pl.cdiv(L, TL))
    return pl.pallas_call(
        _conv1x1_nc_kernel,
        out_shape=jax.ShapeDtypeStruct((N, OUT_CH, L), x_ncl.dtype),
        grid_spec=pltpu.PrefetchScalarGridSpec(
            num_scalar_prefetch=0,
            grid=grid,
            in_specs=[
                pl.BlockSpec((1, IN_CH, TL), lambda n, l: (n, 0, l)),
                pl.BlockSpec((OUT_CH, IN_CH), lambda n, l: (0, 0)),
                pl.BlockSpec((OUT_CH, 1), lambda n, l: (0, 0)),
            ],
            out_specs=pl.BlockSpec((1, OUT_CH, TL), lambda n, l: (n, 0, l)),
        ),
        compiler_params=pltpu.CompilerParams(
            dimension_semantics=("parallel", "parallel"),
        ),
    )(x_ncl, w_oi, b_o1)


def decoder_ai85cnn_cib_forward(x_ncl, weight_oc_ic_k, bias_o):
    """Forward pass matching the PyTorch module.

    x_ncl:          (N, 112, L)  float32   (PyTorch NCL conv1d input)
    weight_oc_ic_k: (64, 112, 1) float32   (PyTorch Conv1d weight layout)
    bias_o:         (64,)        float32
    returns:        (N, 64, L)   float32
    """
    N, C_in, L = x_ncl.shape
    assert C_in == IN_CH
    assert weight_oc_ic_k.shape == (OUT_CH, IN_CH, 1), "expects kernel_size == 1"
    assert bias_o.shape == (OUT_CH,)

    w = weight_oc_ic_k[:, :, 0]            # (OUT_CH, IN_CH)
    b = bias_o.reshape(OUT_CH, 1)          # broadcasts over L inside the kernel

    return conv1x1_pallas(x_ncl, w, b)     # (N, OUT_CH, L) — no transposes


if __name__ == "__main__":
    key = jax.random.PRNGKey(0)
    kx, kw, kb = jax.random.split(key, 3)

    # Small shapes consistent with the module: batch=2, in_ch=112, length=16.
    N, L = 2, 16
    x = jax.random.normal(kx, (N, IN_CH, L), dtype=jnp.float32)

    # Deterministic parameter init (Conv1d-like uniform fan-in scaling).
    fan_in = IN_CH * 1
    bound = 1.0 / (fan_in ** 0.5)
    weight = jax.random.uniform(
        kw, (OUT_CH, IN_CH, 1), minval=-bound, maxval=bound, dtype=jnp.float32)
    bias = jax.random.uniform(
        kb, (OUT_CH,), minval=-bound, maxval=bound, dtype=jnp.float32)

    y = decoder_ai85cnn_cib_forward(x, weight, bias)
    y = jax.block_until_ready(y)

    # Sanity check against plain-JAX reference (same math as torch.nn.Conv1d, k=1).
    y_ref = jnp.einsum("ncl,oc->nol", x, weight[:, :, 0]) + bias[None, :, None]
    assert y.shape == (N, OUT_CH, L)
    assert jnp.allclose(y, y_ref, atol=1e-5, rtol=1e-5)

    print("KERNEL_OK")
</pallas_src>

<mosaic_0001>
module attributes {stable_mosaic.version = 11 : i64} {
  func.func @_conv1x1_nc_kernel(%arg0: i32, %arg1: i32, %arg2: memref<1x112x16xf32, #tpu.memory_space<vmem>>, %arg3: memref<64x112xf32, #tpu.memory_space<vmem>>, %arg4: memref<64x1xf32, #tpu.memory_space<vmem>>, %arg5: memref<1x64x16xf32, #tpu.memory_space<vmem>>) attributes {dimension_semantics = [#tpu.dimension_semantics<parallel>, #tpu.dimension_semantics<parallel>], iteration_bounds = array<i64: 2, 1>, scalar_prefetch = 0 : i64, scratch_operands = 0 : i64, tpu.core_type = #tpu.core_type<tc>, window_params = [{transform_indices = @transform_0, window_bounds = array<i64: 1, 112, 16>}, {pipeline_mode = #tpu.pipeline_mode<synchronous>, transform_indices = @transform_1, window_bounds = array<i64: 64, 112>}, {pipeline_mode = #tpu.pipeline_mode<synchronous>, transform_indices = @transform_2, window_bounds = array<i64: 64, 1>}, {transform_indices = @transform_3, window_bounds = array<i64: 1, 64, 16>}]} {
    %c0 = arith.constant 0 : index
    %c0_0 = arith.constant 0 : index
    %0 = vector.load %arg3[%c0, %c0_0] : memref<64x112xf32, #tpu.memory_space<vmem>>, vector<64x112xf32>
    %c0_1 = arith.constant 0 : index
    %c0_2 = arith.constant 0 : index
    %c0_3 = arith.constant 0 : index
    %1 = vector.load %arg2[%c0_1, %c0_2, %c0_3] : memref<1x112x16xf32, #tpu.memory_space<vmem>>, vector<1x112x16xf32>
    %2 = vector.shape_cast %1 : vector<1x112x16xf32> to vector<112x16xf32>
    %cst = arith.constant dense<0.000000e+00> : vector<64x16xf32>
    %3 = tpu.matmul %0, %2, %cst {dimension_numbers = #tpu.dot_dimension_numbers<[1], [0], [0], [1], [0, 0, 1, 1], [], []>} : vector<64x112xf32>, vector<112x16xf32>, vector<64x16xf32> -> vector<64x16xf32>
    %c0_4 = arith.constant 0 : index
    %c0_5 = arith.constant 0 : index
    %4 = vector.load %arg4[%c0_4, %c0_5] : memref<64x1xf32, #tpu.memory_space<vmem>>, vector<64x1xf32>
    %5 = vector.broadcast %4 : vector<64x1xf32> to vector<64x16xf32>
    %6 = arith.addf %3, %5 : vector<64x16xf32>
    %c0_6 = arith.constant 0 : index
    %c0_7 = arith.constant 0 : index
    %c0_8 = arith.constant 0 : index
    %7 = vector.load %arg5[%c0_6, %c0_7, %c0_8] : memref<1x64x16xf32, #tpu.memory_space<vmem>>, vector<1x64x16xf32>
    %8 = vector.shape_cast %7 : vector<1x64x16xf32> to vector<64x16xf32>
    %9 = vector.shape_cast %6 : vector<64x16xf32> to vector<1x64x16xf32>
    tpu.vector_store %arg5[%c0_6, %c0_7, %c0_8], %9 {strides = array<i32>} : memref<1x64x16xf32, #tpu.memory_space<vmem>>, vector<1x64x16xf32>,
    return
  }
  func.func @transform_0(%arg0: i32, %arg1: i32) -> (i32, i32, i32) {
    %c0_i32 = arith.constant 0 : i32
    %c0_i32_0 = arith.constant 0 : i32
    return %arg0, %c0_i32, %arg1 : i32, i32, i32
  }
  func.func @transform_1(%arg0: i32, %arg1: i32) -> (i32, i32) {
    %c0_i32 = arith.constant 0 : i32
    %c0_i32_0 = arith.constant 0 : i32
    %c0_i32_1 = arith.constant 0 : i32
    return %c0_i32, %c0_i32_0 : i32, i32
  }
  func.func @transform_2(%arg0: i32, %arg1: i32) -> (i32, i32) {
    %c0_i32 = arith.constant 0 : i32
    %c0_i32_0 = arith.constant 0 : i32
    %c0_i32_1 = arith.constant 0 : i32
    return %c0_i32, %c0_i32_0 : i32, i32
  }
  func.func @transform_3(%arg0: i32, %arg1: i32) -> (i32, i32, i32) {
    %c0_i32 = arith.constant 0 : i32
    %c0_i32_0 = arith.constant 0 : i32
    return %arg0, %c0_i32, %arg1 : i32, i32, i32
  }
}

</mosaic_0001>

<llo_original>
// kernel: tpu_custom_call.1
$region0: #{tpu_custom_call.1}
  #allocation0 [shape = 'u32[]', space=smem, size = 0x4, offset = 0x4, fixed_abs, tag = 'smem constant byte address 0x4 - core index']
  #allocation1 [shape = 'u32[144,128]{1,0:T(1,128)}', space=vmem, size = 0x12000, scoped, tag = 'internal scratch']
  %s0 = inlined_call_operand.vmem [shape: f32[2,112,16], index: 0, kind: input, shape index: {}]
  %s1 = inlined_call_operand.vmem [shape: f32[64,112], index: 1, kind: input, shape index: {}]
  %s2 = inlined_call_operand.vmem [shape: f32[64,1], index: 2, kind: input, shape index: {}]
  %s3 = inlined_call_operand.vmem [shape: f32[2,64,16], index: 3, kind: output, shape index: {}]
  %s4 = sld [smem:[#allocation0]]
  $region45: #{tpu_custom_call.1} parent=0
    _
  %s6 = ssub.s32 1, %s4
  %s7 = scalar_select 0, %s6, %s4
  loop: start=0, step=1, limit=4
  $region2: #{tpu_custom_call.1} parent=0 // loop_pre_header
    _
  $region3: #{tpu_custom_call.1} parent=0 // loop_header
    %s9 = sphi 0, %s13
    %p10 = scmp.ge.s32.totalorder %s9, 4
    %s16 = sphi 0, %s28
    %s17 = sphi 0, %s24
    %s18 = sphi 0, %s16
    %s19 = sphi 0, %s17
    %s20 = sphi 0, %s18
    %s21 = sphi 0, %s19
    %s33 = sphi 0, %s35
    %s36 = sphi 0, %s33
    %s37 = sphi 0, %s36
    %s53 = sphi 0, %s37
    %s57 = sphi 0, %s57
    %s59 = sphi 0, %s57
    %s60 = sphi 0, %s59
    %s74 = sphi 0, %s60
    %s78 = sphi 0, %s78
    %s80 = sphi 0, %s78
    %s81 = sphi 0, %s80
    %s95 = sphi 0, %s81
    %s103 = sphi 0, %s105
    %s106 = sphi 0, %s103
    %s107 = sphi 0, %s106
    %s123 = sphi 0, %s107
  $region4: #{tpu_custom_call.1} parent=0 // loop_header_branch
    %12 = sbr.rel (%p10) target = $region8
  $region5: #{tpu_custom_call.1} parent=0 // loop_body
    %s14 = ssub.s32 %s9, 1
    %s15 = ssub.s32 %s9, 2
    %s22 = sadd.s32 1, %s17
    %p23 = scmp.ge.s32.totalorder %s22, 1
    %s24 = scalar_select %p23, 0, %s22
    %s25 = sadd.s32 1, %s16
    %s26 = scalar_select %p23, %s25, %s16
    %p27 = scmp.ge.s32.totalorder %s26, 2
    %s28 = scalar_select %p27, 0, %s26
    %s29 = ssub.s32 %s16, %s28
    %s30 = ssub.s32 %s17, %s24
    %s31 = sor.u32 %s29, %s30
    %p32 = scmp.eq.s32.totalorder %s31, 0
    %s34 = sadd.s32 %s33, 1
    %s35 = scalar_select %p32, %s33, %s34
    %p38 = pneg %p32
    %p39 = scmp.eq.s32.totalorder %s9, 1
    %p40 = por %p38, %p39
    %p41 = scmp.ne.s32.totalorder %s33, %s36
    %p42 = scmp.eq.s32.totalorder %s9, 0
    %p43 = por %p41, %p42
    %p44 = scmp.ne.s32.totalorder %s33, %s36
    %p45 = scmp.eq.s32.totalorder %s14, 1
    %p46 = por %p44, %p45
    %p47 = scmp.ne.s32.totalorder %s36, %s37
    %p48 = scmp.eq.s32.totalorder %s14, 0
    %p49 = por %p47, %p48
    %p50 = scmp.ne.s32.totalorder %s36, %s37
    %p51 = scmp.eq.s32.totalorder %s15, 1
    %p52 = por %p50, %p51
    %p54 = scmp.ne.s32.totalorder %s37, %s53
    %p55 = scmp.eq.s32.totalorder %s15, 0
    %p56 = por %p54, %p55
    %s58 = sadd.s32 %s57, 1
    %p61 = scmp.eq.s32.totalorder %s9, 1
    %p62 = scmp.ne.s32.totalorder %s57, %s59
    %p63 = scmp.eq.s32.totalorder %s9, 0
    %p64 = por %p62, %p63
    %p65 = scmp.ne.s32.totalorder %s57, %s59
    %p66 = scmp.eq.s32.totalorder %s14, 1
    %p67 = por %p65, %p66
    %p68 = scmp.ne.s32.totalorder %s59, %s60
    %p69 = scmp.eq.s32.totalorder %s14, 0
    %p70 = por %p68, %p69
    %p71 = scmp.ne.s32.totalorder %s59, %s60
    %p72 = scmp.eq.s32.totalorder %s15, 1
    %p73 = por %p71, %p72
    %p75 = scmp.ne.s32.totalorder %s60, %s74
    %p76 = scmp.eq.s32.totalorder %s15, 0
    %p77 = por %p75, %p76
    %s79 = sadd.s32 %s78, 1
    %p82 = scmp.eq.s32.totalorder %s9, 1
    %p83 = scmp.ne.s32.totalorder %s78, %s80
    %p84 = scmp.eq.s32.totalorder %s9, 0
    %p85 = por %p83, %p84
    %p86 = scmp.ne.s32.totalorder %s78, %s80
    %p87 = scmp.eq.s32.totalorder %s14, 1
    %p88 = por %p86, %p87
    %p89 = scmp.ne.s32.totalorder %s80, %s81
    %p90 = scmp.eq.s32.totalorder %s14, 0
    %p91 = por %p89, %p90
    %p92 = scmp.ne.s32.totalorder %s80, %s81
    %p93 = scmp.eq.s32.totalorder %s15, 1
    %p94 = por %p92, %p93
    %p96 = scmp.ne.s32.totalorder %s81, %s95
    %p97 = scmp.eq.s32.totalorder %s15, 0
    %p98 = por %p96, %p97
    %s99 = ssub.s32 %s16, %s28
    %s100 = ssub.s32 %s17, %s24
    %s101 = sor.u32 %s99, %s100
    %p102 = scmp.eq.s32.totalorder %s101, 0
    %s104 = sadd.s32 %s103, 1
    %s105 = scalar_select %p102, %s103, %s104
    %p108 = pneg %p102
    %p109 = scmp.eq.s32.totalorder %s9, 1
    %p110 = por %p108, %p109
    %p111 = scmp.ne.s32.totalorder %s103, %s106
    %p112 = scmp.eq.s32.totalorder %s9, 0
    %p113 = por %p111, %p112
    %p114 = scmp.ne.s32.totalorder %s103, %s106
    %p115 = scmp.eq.s32.totalorder %s14, 1
    %p116 = por %p114, %p115
    %p117 = scmp.ne.s32.totalorder %s106, %s107
    %p118 = scmp.eq.s32.totalorder %s14, 0
    %p119 = por %p117, %p118
    %p120 = scmp.ne.s32.totalorder %s106, %s107
    %p121 = scmp.eq.s32.totalorder %s15, 1
    %p122 = por %p120, %p121
    %p124 = scmp.ne.s32.totalorder %s107, %s123
    %p125 = scmp.eq.s32.totalorder %s15, 0
    %p126 = por %p124, %p125
    %p127 = scmp.le.s32.totalorder 1, %s9
    %p128 = scmp.lt.s32.totalorder %s9, 3
    %p129 = pnand %p127, %p128
    %p130 = pneg %p129
    // Predicated region
    $region9: #{tpu_custom_call.1} parent=5 // pred_check
      _
    $region10: #{tpu_custom_call.1} parent=5 // pred_check_branch
      %132 = sbr.rel (%p129) target = $region12
    $region11: #{tpu_custom_call.1} parent=5 // pred_region
      %s133 = ssub.s32 %s9, 1
      // Predicated region
      $region13: #{tpu_custom_call.1} parent=11 // pred_check
        %p134 = pneg %p70
      $region14: #{tpu_custom_call.1} parent=11 // pred_check_branch
        %136 = sbr.rel (%p134) target = $region16
      $region15: #{tpu_custom_call.1} parent=11 // pred_region
        _
      $region16: #{tpu_custom_call.1} parent=11 // pred_fallthru
        _
      // Predicated region
      $region17: #{tpu_custom_call.1} parent=11 // pred_check
        %p137 = pneg %p91
      $region18: #{tpu_custom_call.1} parent=11 // pred_check_branch
        %139 = sbr.rel (%p137) target = $region20
      $region19: #{tpu_custom_call.1} parent=11 // pred_region
        _
      $region20: #{tpu_custom_call.1} parent=11 // pred_fallthru
        _
    $region12: #{tpu_custom_call.1} parent=5 // pred_fallthru
      _
    %p140 = scmp.lt.s32.totalorder %s9, 2
    // Predicated region
    $region21: #{tpu_custom_call.1} parent=5 // pred_check
      %p141 = pneg %p140
    $region22: #{tpu_custom_call.1} parent=5 // pred_check_branch
      %143 = sbr.rel (%p141) target = $region24
    $region23: #{tpu_custom_call.1} parent=5 // pred_region
      // Predicated region
      $region25: #{tpu_custom_call.1} parent=23 // pred_check
        %p144 = pneg %p43
      $region26: #{tpu_custom_call.1} parent=23 // pred_check_branch
        %146 = sbr.rel (%p144) target = $region28
      $region27: #{tpu_custom_call.1} parent=23 // pred_region
        %p147 = scmp.lt.s32.totalorder %s16, 1
        %s148 = scalar_select %p147, %s16, 1
        %p149 = scmp.lt.s32.totalorder %s17, 0
        %s150 = scalar_select %p149, %s17, 0
        %s151 = smul.addr %s148, 14
        %s152 = sadd.s32 %s150, %s151
        %s153 = smul.addr %s152, 8
        %s154 = scalar_lea.vmem %s0, %s153
      $region28: #{tpu_custom_call.1} parent=23 // pred_fallthru
        _
    $region24: #{tpu_custom_call.1} parent=5 // pred_fallthru
      _
    %p155 = scmp.le.s32.totalorder 1, %s9
    %p156 = scmp.lt.s32.totalorder %s9, 3
    %p157 = pnand %p155, %p156
    %p158 = pneg %p157
    // Predicated region
    $region29: #{tpu_custom_call.1} parent=5 // pred_check
      _
    $region30: #{tpu_custom_call.1} parent=5 // pred_check_branch
      %160 = sbr.rel (%p157) target = $region32
    $region31: #{tpu_custom_call.1} parent=5 // pred_region
      %s161 = ssub.s32 %s9, 1
      %p162 = scmp.lt.s32.totalorder %s18, 1
      %s163 = scalar_select %p162, %s18, 1
      %p164 = scmp.lt.s32.totalorder %s19, 0
      %s165 = scalar_select %p164, %s19, 0
      %s166 = smul.addr %s163, 14
      %s167 = sadd.s32 %s165, %s166
      %s168 = smul.addr %s167, 8
      %s169 = scalar_lea.vmem %s0, %s168
      %p170 = pneg %p49
      %p171 = pneg %p46
      %p172 = pneg %p70
      %p173 = pneg %p67
      %p174 = pneg %p91
      %p175 = pneg %p88
      %p176 = pneg %p119
      %p177 = pneg %p116
      %p178 = scmp.lt.s32.totalorder %s18, 1
      %s179 = scalar_select %p178, %s18, 1
      %p180 = scmp.lt.s32.totalorder %s19, 0
      %s181 = scalar_select %p180, %s19, 0
      %s182 = smul.addr %s179, 8
      %s183 = sadd.s32 %s181, %s182
      %s184 = smul.addr %s183, 8
      %s185 = scalar_lea.vmem %s3, %s184
      %p186 = scmp.lt.s32.totalorder %s18, 1
      %s187 = scalar_select %p186, %s18, 1
      %p188 = scmp.lt.s32.totalorder %s19, 0
      %s189 = scalar_select %p188, %s19, 0
      %s190 = smul.addr %s187, 14
      %s191 = sadd.s32 %s189, %s190
      %s192 = smul.addr %s191, 8
      %s193 = scalar_lea.vmem %s0, %s192
      %p194 = scmp.lt.s32.totalorder %s18, 1
      %s195 = scalar_select %p194, %s18, 1
      %p196 = scmp.lt.s32.totalorder %s19, 0
      %s197 = scalar_select %p196, %s19, 0
      %s198 = smul.addr %s195, 8
      %s199 = sadd.s32 %s197, %s198
      %s200 = smul.addr %s199, 8
      %s201 = scalar_lea.vmem %s3, %s200
      %v202 = vld [vmem:[%s1] sm:$0xff]
      %v203 = vld [vmem:[%s1 + $0x8] sm:$0xff]
      %v204 = vld [vmem:[%s1 + $0x10] sm:$0xff]
      %v205 = vld [vmem:[%s1 + $0x18] sm:$0xff]
      %v206 = vld [vmem:[%s1 + $0x20] sm:$0xff]
      %v207 = vld [vmem:[%s1 + $0x28] sm:$0xff]
      %v208 = vld [vmem:[%s1 + $0x30] sm:$0xff]
      %v209 = vld [vmem:[%s1 + $0x38] sm:$0xff]
      %v210 = vld [vmem:[%s193] sm:$0xff]
      %v211 = vld [vmem:[%s193 + $0x8] sm:$0xff]
      %v212 = vld [vmem:[%s193 + $0x10] sm:$0xff]
      %v213 = vld [vmem:[%s193 + $0x18] sm:$0xff]
      %v214 = vld [vmem:[%s193 + $0x20] sm:$0xff]
      %v215 = vld [vmem:[%s193 + $0x28] sm:$0xff]
      %v216 = vld [vmem:[%s193 + $0x30] sm:$0xff]
      %v217 = vld [vmem:[%s193 + $0x38] sm:$0xff]
      %v218 = vld [vmem:[%s193 + $0x40] sm:$0xff]
      %v219 = vld [vmem:[%s193 + $0x48] sm:$0xff]
      %v220 = vld [vmem:[%s193 + $0x50] sm:$0xff]
      %v221 = vld [vmem:[%s193 + $0x58] sm:$0xff]
      %v222 = vld [vmem:[%s193 + $0x60] sm:$0xff]
      %v223 = vld [vmem:[%s193 + $0x68] sm:$0xff]
      %v224 = vld [vmem:[%s2] sm:$0xff]
      %v225 = vld [vmem:[%s2 + $0x8] sm:$0xff]
      %v226 = vld [vmem:[%s2 + $0x10] sm:$0xff]
      %v227 = vld [vmem:[%s2 + $0x18] sm:$0xff]
      %v228 = vld [vmem:[%s2 + $0x20] sm:$0xff]
      %v229 = vld [vmem:[%s2 + $0x28] sm:$0xff]
      %v230 = vld [vmem:[%s2 + $0x30] sm:$0xff]
      %v231 = vld [vmem:[%s2 + $0x38] sm:$0xff]
      %233 = vset.pattern.permute.xlu0 0
      %234 = vperm.xlu0 %233, %v224
      %v235 = vpop.permute.xlu0 %234
      %238 = vset.pattern.permute.xlu0 0
      %239 = vperm.xlu0 %238, %v225
      %v240 = vpop.permute.xlu0 %239
      %243 = vset.pattern.permute.xlu0 0
      %244 = vperm.xlu0 %243, %v226
      %v245 = vpop.permute.xlu0 %244
      %248 = vset.pattern.permute.xlu0 0
      %249 = vperm.xlu0 %248, %v227
      %v250 = vpop.permute.xlu0 %249
      %253 = vset.pattern.permute.xlu0 0
      %254 = vperm.xlu0 %253, %v228
      %v255 = vpop.permute.xlu0 %254
      %258 = vset.pattern.permute.xlu0 0
      %259 = vperm.xlu0 %258, %v229
      %v260 = vpop.permute.xlu0 %259
      %263 = vset.pattern.permute.xlu0 0
      %264 = vperm.xlu0 %263, %v230
      %v265 = vpop.permute.xlu0 %264
      %268 = vset.pattern.permute.xlu0 0
      %269 = vperm.xlu0 %268, %v231
      %v270 = vpop.permute.xlu0 %269
      %vm272 = vcmask 916480
      %v274 = vsel %vm272, %v202, 0
      %v277 = vsel %vm272, %v203, 0
      %v280 = vsel %vm272, %v204, 0
      %v283 = vsel %vm272, %v205, 0
      %v286 = vsel %vm272, %v206, 0
      %v289 = vsel %vm272, %v207, 0
      %v292 = vsel %vm272, %v208, 0
      %v295 = vsel %vm272, %v209, 0
      %297 = vmatprep.subr.mxu0 0.0
      %298 = vmatpush1.msra.mxu0 %v210
      %299 = vmatprep.subr.mxu0 0.0
      %300 = vmatpush1.msra.mxu0 %v211
      %301 = vmatprep.subr.mxu0 0.0
      %302 = vmatpush1.msra.mxu0 %v212
      %303 = vmatprep.subr.mxu0 0.0
      %304 = vmatpush1.msra.mxu0 %v213
      %305 = vmatprep.subr.mxu0 0.0
      %306 = vmatpush1.msra.mxu0 %v214
      %307 = vmatprep.subr.mxu0 0.0
      %308 = vmatpush1.msra.mxu0 %v215
      %309 = vmatprep.subr.mxu0 0.0
      %310 = vmatpush1.msra.mxu0 %v216
      %311 = vmatprep.subr.mxu0 0.0
      %312 = vmatpush1.msra.mxu0 %v217
      %313 = vmatprep.subr.mxu0 0.0
      %314 = vmatpush1.msra.mxu0 %v218
      %315 = vmatprep.subr.mxu0 0.0
      %316 = vmatpush1.msra.mxu0 %v219
      %317 = vmatprep.subr.mxu0 0.0
      %318 = vmatpush1.msra.mxu0 %v220
      %319 = vmatprep.subr.mxu0 0.0
      %320 = vmatpush1.msra.mxu0 %v221
      %321 = vmatprep.subr.mxu0 0.0
      %322 = vmatpush1.msra.mxu0 %v222
      %323 = vmatprep.subr.mxu0 0.0
      %324 = vmatpush1.msra.mxu0 %v223
      %325 = vmatprep.subr.mxu0 0.0
      %326 = vmatpush1.msra.mxu0 0.0
      %327 = vmatprep.subr.mxu0 0.0
      %328 = vmatpush1.msra.mxu0 0.0
      %329 = vmatprep.subr.mxu0 0.0
      %330 = vmatpush1.msra.mxu0 0.0
      %331 = vmatprep.subr.mxu0 0.0
      %332 = vmatpush1.msra.mxu0 0.0
      %333 = vmatprep.subr.mxu0 0.0
      %334 = vmatpush1.msra.mxu0 0.0
      %335 = vmatprep.subr.mxu0 0.0
      %336 = vmatpush1.msra.mxu0 0.0
      %337 = vmatprep.subr.mxu0 0.0
      %338 = vmatpush1.msra.mxu0 0.0
      %339 = vmatprep.subr.mxu0 0.0
      %340 = vmatpush1.msra.mxu0 0.0
      %341 = vmatprep.subr.mxu0 0.0
      %342 = vmatpush1.msra.mxu0 0.0
      %343 = vmatprep.subr.mxu0 0.0
      %344 = vmatpush1.msra.mxu0 0.0
      %345 = vmatprep.subr.mxu0 0.0
      %346 = vmatpush1.msra.mxu0 0.0
      %347 = vmatprep.subr.mxu0 0.0
      %348 = vmatpush1.msra.mxu0 0.0
      %349 = vmatprep.subr.mxu0 0.0
      %350 = vmatpush1.msra.mxu0 0.0
      %351 = vmatprep.subr.mxu0 0.0
      %352 = vmatpush1.msra.mxu0 0.0
      %353 = vmatprep.subr.mxu0 0.0
      %354 = vmatpush1.msra.mxu0 0.0
      %355 = vmatprep.subr.mxu0 0.0
      %356 = vmatpush1.msra.mxu0 0.0
      %357 = vmatprep.subr.mxu0 0.0
      %358 = vmatpush1.msra.mxu0 0.0
      %359 = vmatprep.subr.mxu0 0.0
      %360 = vmatpush1.msra.mxu0 0.0
      %361 = vmatprep.mubr.f32.mxu0 0.0
      %362 = vmatmul.mubr.f32.gmra.mrb[0].mxu0 %v274
      %v363 = vpop.f32.mrb[0].mxu0
      %v364 = vadd.f32 %v235, %v363
      %v365 = vpop.f32.mrb[0].mxu0
      %366 = vmatprep.mubr.f32.mxu0 0.0
      %367 = vmatmul.mubr.f32.gmra.mrb[0].mxu0 %v277
      %v368 = vpop.f32.mrb[0].mxu0
      %v369 = vadd.f32 %v240, %v368
      %v370 = vpop.f32.mrb[0].mxu0
      %371 = vmatprep.mubr.f32.mxu0 0.0
      %372 = vmatmul.mubr.f32.gmra.mrb[0].mxu0 %v280
      %v373 = vpop.f32.mrb[0].mxu0
      %v374 = vadd.f32 %v245, %v373
      %v375 = vpop.f32.mrb[0].mxu0
      %376 = vmatprep.mubr.f32.mxu0 0.0
      %377 = vmatmul.mubr.f32.gmra.mrb[0].mxu0 %v283
      %v378 = vpop.f32.mrb[0].mxu0
      %v379 = vadd.f32 %v250, %v378
      %v380 = vpop.f32.mrb[0].mxu0
      %381 = vmatprep.mubr.f32.mxu0 0.0
      %382 = vmatmul.mubr.f32.gmra.mrb[0].mxu0 %v286
      %v383 = vpop.f32.mrb[0].mxu0
      %v384 = vadd.f32 %v255, %v383
      %v385 = vpop.f32.mrb[0].mxu0
      %386 = vmatprep.mubr.f32.mxu0 0.0
      %387 = vmatmul.mubr.f32.gmra.mrb[0].mxu0 %v289
      %v388 = vpop.f32.mrb[0].mxu0
      %v389 = vadd.f32 %v260, %v388
      %v390 = vpop.f32.mrb[0].mxu0
      %391 = vmatprep.mubr.f32.mxu0 0.0
      %392 = vmatmul.mubr.f32.gmra.mrb[0].mxu0 %v292
      %v393 = vpop.f32.mrb[0].mxu0
      %v394 = vadd.f32 %v265, %v393
      %v395 = vpop.f32.mrb[0].mxu0
      %396 = vmatprep.mubr.f32.mxu0 0.0
      %397 = vmatmul.mubr.f32.gmra.mrb[0].mxu0 %v295
      %v398 = vpop.f32.mrb[0].mxu0
      %v399 = vadd.f32 %v270, %v398
      %v400 = vpop.f32.mrb[0].mxu0
      %401 = vdwg.mxu0
      %vm402 = vcmask 130048
      %403 = vst.msk [vmem:[%s201] sm:$0xff] %vm402, %v364
      %404 = vst.msk [vmem:[%s201 + $0x8] sm:$0xff] %vm402, %v369
      %405 = vst.msk [vmem:[%s201 + $0x10] sm:$0xff] %vm402, %v374
      %406 = vst.msk [vmem:[%s201 + $0x18] sm:$0xff] %vm402, %v379
      %407 = vst.msk [vmem:[%s201 + $0x20] sm:$0xff] %vm402, %v384
      %408 = vst.msk [vmem:[%s201 + $0x28] sm:$0xff] %vm402, %v389
      %409 = vst.msk [vmem:[%s201 + $0x30] sm:$0xff] %vm402, %v394
      %410 = vst.msk [vmem:[%s201 + $0x38] sm:$0xff] %vm402, %v399
      %p411 = scmp.lt.s32.totalorder %s18, 1
      %s412 = scalar_select %p411, %s18, 1
      %p413 = scmp.lt.s32.totalorder %s19, 0
      %s414 = scalar_select %p413, %s19, 0
      %s415 = smul.addr %s412, 8
      %s416 = sadd.s32 %s414, %s415
      %s417 = smul.addr %s416, 8
      %s418 = scalar_lea.vmem %s3, %s417
      // Predicated region
      $region33: #{tpu_custom_call.1} parent=31 // pred_check
        %p419 = pneg %p116
      $region34: #{tpu_custom_call.1} parent=31 // pred_check_branch
        %421 = sbr.rel (%p419) target = $region36
      $region35: #{tpu_custom_call.1} parent=31 // pred_region
        _
      $region36: #{tpu_custom_call.1} parent=31 // pred_fallthru
        _
    $region32: #{tpu_custom_call.1} parent=5 // pred_fallthru
      _
    %p422 = scmp.le.s32.totalorder 2, %s9
    // Predicated region
    $region37: #{tpu_custom_call.1} parent=5 // pred_check
      %p423 = pneg %p422
    $region38: #{tpu_custom_call.1} parent=5 // pred_check_branch
      %425 = sbr.rel (%p423) target = $region40
    $region39: #{tpu_custom_call.1} parent=5 // pred_region
      %s426 = ssub.s32 %s9, 2
      // Predicated region
      $region41: #{tpu_custom_call.1} parent=39 // pred_check
        %p427 = pneg %p122
      $region42: #{tpu_custom_call.1} parent=39 // pred_check_branch
        %429 = sbr.rel (%p427) target = $region44
      $region43: #{tpu_custom_call.1} parent=39 // pred_region
        %p430 = scmp.lt.s32.totalorder %s20, 1
        %s431 = scalar_select %p430, %s20, 1
        %p432 = scmp.lt.s32.totalorder %s21, 0
        %s433 = scalar_select %p432, %s21, 0
        %s434 = smul.addr %s431, 8
        %s435 = sadd.s32 %s433, %s434
        %s436 = smul.addr %s435, 8
        %s437 = scalar_lea.vmem %s3, %s436
      $region44: #{tpu_custom_call.1} parent=39 // pred_fallthru
        _
    $region40: #{tpu_custom_call.1} parent=5 // pred_fallthru
      _
  $region6: #{tpu_custom_call.1} parent=0 // loop_footer
    %s13 = sadd.s32 1, %s9
  $region7: #{tpu_custom_call.1} parent=0 // loop_footer_branch
    %8 = sbr.rel target = $region3
  $region8: #{tpu_custom_call.1} parent=0 // loop_exit
    _

</llo_original>
